<compile_context>
chip_gen: v5e
topology: v5e:2x2
jax: 0.10.0
libtpu: 0.0.40
codegen_flags: <defaults>
</compile_context>

<pallas_src>
from collections import OrderedDict

import jax
import jax.numpy as jnp
from jax.experimental import pallas as pl
from jax.experimental.pallas import tpu as pltpu

K = 3  # 3x3 backbone conv


def _make_kernel(N, H, W, Cin, Cout):
    WP = (W + 2) * Cin   # padded image row, (w, cin) flattened on the lane axis
    WI = W * Cin         # unpadded image row width
    WO = W * Cout        # output row, (w, cout) flattened -> lane dense (=128 here)

    def kernel(x_ref, mrow_ref, w_ref, brow_ref, o_ref, xpad_ref):
        # x_ref    : (N, H, W*Cin)      raw images (NHWC, (w, cin) flattened)
        # mrow_ref : (1, WP)            per-channel image_mean tiled over (w, cin)
        # w_ref    : (K, WP, WO)        banded, normalization-folded conv weights
        # brow_ref : (1, WO)            normalization-folded bias tiled over (w, cout)
        # o_ref    : (N, H, W*Cout)     lane-dense output
        # xpad_ref : VMEM (N, H+2, WP)  mean-padded raw image scratch

        # mean-pad the raw image: equivalent to zero-padding the normalized
        # image since the normalization is folded into the weights.
        xpad_ref[...] = jnp.broadcast_to(mrow_ref[...], (N, H + 2, WP))
        xpad_ref[:, 1:H + 1, Cin:Cin + WI] = x_ref[...]

        # conv + bias as K accumulated banded matmuls (one per kernel row dy);
        # the folded bias seeds the f32 accumulator.
        acc = jnp.broadcast_to(brow_ref[...], (N * H, WO)).astype(jnp.float32)
        for dy in range(K):
            lhs = xpad_ref[:, dy:dy + H, :].reshape(N * H, WP)
            acc = acc + jnp.dot(lhs, w_ref[dy],
                                preferred_element_type=jnp.float32)

        # ReLU + lane-dense store (last dim = W*Cout = 128 -> unmasked vst).
        o_ref[...] = jnp.maximum(acc, 0.0).reshape(N, H, WO).astype(o_ref.dtype)

    return kernel


def transform_backbone_forward(images_nchw, image_mean, image_std,
                               conv_weight_oihw, conv_bias):
    """Fused transform (normalize) + backbone (3x3 conv, SAME pad, ReLU).

    images_nchw      : (N, Cin, H, W) float32
    image_mean/std   : (Cin,) float32
    conv_weight_oihw : (Cout, Cin, 3, 3) float32
    conv_bias        : (Cout,) float32
    Returns OrderedDict {'0': features (N, Cout, H, W)}.
    """
    N, Cin, H, W = images_nchw.shape
    Cout = conv_weight_oihw.shape[0]
    WP = (W + 2) * Cin
    WO = W * Cout

    # --- fold normalization into the conv parameters (host side, O(weights)):
    #     conv((x - mean)/std, W) + b == conv(x, W/std) + b'
    #     with b' = b - sum_{i,ky,kx} W[o,i,ky,kx] * mean[i] / std[i],
    #     valid everywhere because the kernel pads the raw image with `mean`.
    inv_std = (1.0 / image_std).astype(jnp.float32)
    w_fold = (conv_weight_oihw * inv_std[None, :, None, None]).astype(jnp.float32)
    b_fold = (conv_bias - jnp.einsum('oikl,i->o', conv_weight_oihw,
                                     image_mean * inv_std)).astype(jnp.float32)

    # --- banded weight slabs: one (WP, WO) matrix per kernel row dy.
    #     M_dy[(w+dx)*Cin + i, w*Cout + o] = w_fold[o, i, dy, dx]
    blk = jnp.transpose(w_fold, (2, 3, 1, 0)).reshape(K, K * Cin, Cout)
    w_banded = jnp.zeros((K, WP, WO), jnp.float32)
    for w in range(W):
        w_banded = w_banded.at[:, w * Cin:w * Cin + K * Cin,
                               w * Cout:(w + 1) * Cout].set(blk)

    mean_row = jnp.tile(image_mean.astype(jnp.float32), W + 2).reshape(1, WP)
    bias_row = jnp.tile(b_fold, W).reshape(1, WO)

    # Glue: layout plumbing only (no compute). NCHW -> (N, H, W*Cin).
    x2 = jnp.transpose(images_nchw, (0, 2, 3, 1)).reshape(N, H, W * Cin)

    kernel = _make_kernel(N, H, W, Cin, Cout)

    out2 = pl.pallas_call(
        kernel,
        out_shape=jax.ShapeDtypeStruct((N, H, WO), jnp.float32),
        grid_spec=pltpu.PrefetchScalarGridSpec(
            num_scalar_prefetch=0,
            grid=(1,),                      # whole (tiny) batch in one step
            in_specs=[
                pl.BlockSpec((N, H, W * Cin), lambda i: (0, 0, 0)),
                pl.BlockSpec((1, WP), lambda i: (0, 0)),
                pl.BlockSpec((K, WP, WO), lambda i: (0, 0, 0)),
                pl.BlockSpec((1, WO), lambda i: (0, 0)),
            ],
            out_specs=pl.BlockSpec((N, H, WO), lambda i: (0, 0, 0)),
            scratch_shapes=[pltpu.VMEM((N, H + 2, WP), jnp.float32)],
        ),
        compiler_params=pltpu.CompilerParams(
            dimension_semantics=("arbitrary",)),
    )(x2, mean_row, w_banded, bias_row)

    # Glue: (N, H, W*Cout) -> NCHW
    features = jnp.transpose(out2.reshape(N, H, W, Cout), (0, 3, 1, 2))
    return OrderedDict([("0", features)])


def _reference(images_nchw, image_mean, image_std, conv_weight_oihw, conv_bias):
    xn = (images_nchw - image_mean[None, :, None, None]) / \
         image_std[None, :, None, None]
    out = jax.lax.conv_general_dilated(
        xn, conv_weight_oihw, window_strides=(1, 1), padding="SAME",
        dimension_numbers=("NCHW", "OIHW", "NCHW"))
    out = out + conv_bias[None, :, None, None]
    return jnp.maximum(out, 0.0)


if __name__ == "__main__":
    # Small shapes consistent with the module: batch=2, 3-channel 16x16 images.
    N, Cin, H, W = 2, 3, 16, 16
    Cout = 8

    key = jax.random.PRNGKey(0)
    k_img, k_w, k_b = jax.random.split(key, 3)

    images = jax.random.uniform(k_img, (N, Cin, H, W), dtype=jnp.float32)

    # Deterministic "transform" parameters (ImageNet-style normalization).
    image_mean = jnp.array([0.485, 0.456, 0.406], dtype=jnp.float32)
    image_std = jnp.array([0.229, 0.224, 0.225], dtype=jnp.float32)

    # Deterministic backbone parameters (Conv2d(Cin, Cout, 3, padding=1)).
    conv_weight = 0.1 * jax.random.normal(k_w, (Cout, Cin, 3, 3),
                                          dtype=jnp.float32)
    conv_bias = 0.01 * jax.random.normal(k_b, (Cout,), dtype=jnp.float32)

    feats = transform_backbone_forward(images, image_mean, image_std,
                                       conv_weight, conv_bias)
    out = jax.block_until_ready(feats["0"])

    ref = _reference(images, image_mean, image_std, conv_weight, conv_bias)
    assert out.shape == (N, Cout, H, W)
    assert jnp.allclose(out, ref, atol=1e-4, rtol=1e-4)

    print("KERNEL_OK")
</pallas_src>

<mosaic_0001>
module attributes {stable_mosaic.version = 11 : i64} {
  func.func @kernel(%arg0: i32, %arg1: memref<2x16x48xf32, #tpu.memory_space<vmem>>, %arg2: memref<1x54xf32, #tpu.memory_space<vmem>>, %arg3: memref<3x54x128xf32, #tpu.memory_space<vmem>>, %arg4: memref<1x128xf32, #tpu.memory_space<vmem>>, %arg5: memref<2x16x128xf32, #tpu.memory_space<vmem>>, %arg6: memref<2x18x54xf32, #tpu.memory_space<vmem>>) attributes {dimension_semantics = [#tpu.dimension_semantics<arbitrary>], iteration_bounds = array<i64: 1>, scalar_prefetch = 0 : i64, scratch_operands = 1 : i64, tpu.core_type = #tpu.core_type<tc>, window_params = [{pipeline_mode = #tpu.pipeline_mode<synchronous>, transform_indices = @transform_0, window_bounds = array<i64: 2, 16, 48>}, {pipeline_mode = #tpu.pipeline_mode<synchronous>, transform_indices = @transform_1, window_bounds = array<i64: 1, 54>}, {pipeline_mode = #tpu.pipeline_mode<synchronous>, transform_indices = @transform_2, window_bounds = array<i64: 3, 54, 128>}, {pipeline_mode = #tpu.pipeline_mode<synchronous>, transform_indices = @transform_3, window_bounds = array<i64: 1, 128>}, {pipeline_mode = #tpu.pipeline_mode<synchronous>, transform_indices = @transform_4, window_bounds = array<i64: 2, 16, 128>}]} {
    %c0 = arith.constant 0 : index
    %c0_0 = arith.constant 0 : index
    %0 = vector.load %arg2[%c0, %c0_0] : memref<1x54xf32, #tpu.memory_space<vmem>>, vector<1x54xf32>
    %1 = vector.shape_cast %0 : vector<1x54xf32> to vector<1x1x54xf32>
    %2 = vector.broadcast %1 : vector<1x1x54xf32> to vector<2x18x54xf32>
    %c0_1 = arith.constant 0 : index
    %c0_2 = arith.constant 0 : index
    %c0_3 = arith.constant 0 : index
    %3 = vector.load %arg6[%c0_1, %c0_2, %c0_3] : memref<2x18x54xf32, #tpu.memory_space<vmem>>, vector<2x18x54xf32>
    tpu.vector_store %arg6[%c0_1, %c0_2, %c0_3], %2 {strides = array<i32>} : memref<2x18x54xf32, #tpu.memory_space<vmem>>, vector<2x18x54xf32>,
    %c0_4 = arith.constant 0 : index
    %c0_5 = arith.constant 0 : index
    %c0_6 = arith.constant 0 : index
    %4 = vector.load %arg1[%c0_4, %c0_5, %c0_6] : memref<2x16x48xf32, #tpu.memory_space<vmem>>, vector<2x16x48xf32>
    %c0_7 = arith.constant 0 : index
    %c1 = arith.constant 1 : index
    %c3 = arith.constant 3 : index
    %5 = vector.load %arg6[%c0_7, %c1, %c3] : memref<2x18x54xf32, #tpu.memory_space<vmem>>, vector<2x16x48xf32>
    tpu.vector_store %arg6[%c0_7, %c1, %c3], %4 {strides = array<i32>} : memref<2x18x54xf32, #tpu.memory_space<vmem>>, vector<2x16x48xf32>,
    %c0_8 = arith.constant 0 : index
    %c0_9 = arith.constant 0 : index
    %6 = vector.load %arg4[%c0_8, %c0_9] : memref<1x128xf32, #tpu.memory_space<vmem>>, vector<1x128xf32>
    %7 = vector.shape_cast %6 : vector<1x128xf32> to vector<1x128xf32>
    %8 = vector.broadcast %7 : vector<1x128xf32> to vector<32x128xf32>
    %c0_10 = arith.constant 0 : index
    %c0_11 = arith.constant 0 : index
    %c0_12 = arith.constant 0 : index
    %9 = vector.load %arg6[%c0_10, %c0_11, %c0_12] : memref<2x18x54xf32, #tpu.memory_space<vmem>>, vector<2x16x54xf32>
    %10 = vector.shape_cast %9 : vector<2x16x54xf32> to vector<32x54xf32>
    %c0_13 = arith.constant 0 : index
    %c0_14 = arith.constant 0 : index
    %c0_15 = arith.constant 0 : index
    %11 = vector.load %arg3[%c0_13, %c0_14, %c0_15] : memref<3x54x128xf32, #tpu.memory_space<vmem>>, vector<1x54x128xf32>
    %12 = vector.shape_cast %11 : vector<1x54x128xf32> to vector<54x128xf32>
    %cst = arith.constant dense<0.000000e+00> : vector<32x128xf32>
    %13 = tpu.matmul %10, %12, %cst {dimension_numbers = #tpu.dot_dimension_numbers<[1], [0], [0], [1], [0, 0, 1, 1], [], []>} : vector<32x54xf32>, vector<54x128xf32>, vector<32x128xf32> -> vector<32x128xf32>
    %14 = arith.addf %8, %13 : vector<32x128xf32>
    %c0_16 = arith.constant 0 : index
    %c1_17 = arith.constant 1 : index
    %c0_18 = arith.constant 0 : index
    %15 = vector.load %arg6[%c0_16, %c1_17, %c0_18] : memref<2x18x54xf32, #tpu.memory_space<vmem>>, vector<2x16x54xf32>
    %16 = vector.shape_cast %15 : vector<2x16x54xf32> to vector<32x54xf32>
    %c1_19 = arith.constant 1 : index
    %c0_20 = arith.constant 0 : index
    %c0_21 = arith.constant 0 : index
    %17 = vector.load %arg3[%c1_19, %c0_20, %c0_21] : memref<3x54x128xf32, #tpu.memory_space<vmem>>, vector<1x54x128xf32>
    %18 = vector.shape_cast %17 : vector<1x54x128xf32> to vector<54x128xf32>
    %cst_22 = arith.constant dense<0.000000e+00> : vector<32x128xf32>
    %19 = tpu.matmul %16, %18, %cst_22 {dimension_numbers = #tpu.dot_dimension_numbers<[1], [0], [0], [1], [0, 0, 1, 1], [], []>} : vector<32x54xf32>, vector<54x128xf32>, vector<32x128xf32> -> vector<32x128xf32>
    %20 = arith.addf %14, %19 : vector<32x128xf32>
    %c0_23 = arith.constant 0 : index
    %c2 = arith.constant 2 : index
    %c0_24 = arith.constant 0 : index
    %21 = vector.load %arg6[%c0_23, %c2, %c0_24] : memref<2x18x54xf32, #tpu.memory_space<vmem>>, vector<2x16x54xf32>
    %22 = vector.shape_cast %21 : vector<2x16x54xf32> to vector<32x54xf32>
    %c2_25 = arith.constant 2 : index
    %c0_26 = arith.constant 0 : index
    %c0_27 = arith.constant 0 : index
    %23 = vector.load %arg3[%c2_25, %c0_26, %c0_27] : memref<3x54x128xf32, #tpu.memory_space<vmem>>, vector<1x54x128xf32>
    %24 = vector.shape_cast %23 : vector<1x54x128xf32> to vector<54x128xf32>
    %cst_28 = arith.constant dense<0.000000e+00> : vector<32x128xf32>
    %25 = tpu.matmul %22, %24, %cst_28 {dimension_numbers = #tpu.dot_dimension_numbers<[1], [0], [0], [1], [0, 0, 1, 1], [], []>} : vector<32x54xf32>, vector<54x128xf32>, vector<32x128xf32> -> vector<32x128xf32>
    %26 = arith.addf %20, %25 : vector<32x128xf32>
    %cst_29 = arith.constant 0.000000e+00 : f32
    %27 = vector.broadcast %cst_29 : f32 to vector<32x128xf32>
    %28 = arith.maximumf %26, %27 : vector<32x128xf32>
    %29 = vector.shape_cast %28 : vector<32x128xf32> to vector<2x16x128xf32>
    %c0_30 = arith.constant 0 : index
    %c0_31 = arith.constant 0 : index
    %c0_32 = arith.constant 0 : index
    %30 = vector.load %arg5[%c0_30, %c0_31, %c0_32] : memref<2x16x128xf32, #tpu.memory_space<vmem>>, vector<2x16x128xf32>
    tpu.vector_store %arg5[%c0_30, %c0_31, %c0_32], %29 {strides = array<i32>} : memref<2x16x128xf32, #tpu.memory_space<vmem>>, vector<2x16x128xf32>,
    return
  }
  func.func @transform_0(%arg0: i32) -> (i32, i32, i32) {
    %c0_i32 = arith.constant 0 : i32
    %c0_i32_0 = arith.constant 0 : i32
    %c0_i32_1 = arith.constant 0 : i32
    %c0_i32_2 = arith.constant 0 : i32
    return %c0_i32, %c0_i32_0, %c0_i32_1 : i32, i32, i32
  }
  func.func @transform_1(%arg0: i32) -> (i32, i32) {
    %c0_i32 = arith.constant 0 : i32
    %c0_i32_0 = arith.constant 0 : i32
    %c0_i32_1 = arith.constant 0 : i32
    return %c0_i32, %c0_i32_0 : i32, i32
  }
  func.func @transform_2(%arg0: i32) -> (i32, i32, i32) {
    %c0_i32 = arith.constant 0 : i32
    %c0_i32_0 = arith.constant 0 : i32
    %c0_i32_1 = arith.constant 0 : i32
    %c0_i32_2 = arith.constant 0 : i32
    return %c0_i32, %c0_i32_0, %c0_i32_1 : i32, i32, i32
  }
  func.func @transform_3(%arg0: i32) -> (i32, i32) {
    %c0_i32 = arith.constant 0 : i32
    %c0_i32_0 = arith.constant 0 : i32
    %c0_i32_1 = arith.constant 0 : i32
    return %c0_i32, %c0_i32_0 : i32, i32
  }
  func.func @transform_4(%arg0: i32) -> (i32, i32, i32) {
    %c0_i32 = arith.constant 0 : i32
    %c0_i32_0 = arith.constant 0 : i32
    %c0_i32_1 = arith.constant 0 : i32
    %c0_i32_2 = arith.constant 0 : i32
    return %c0_i32, %c0_i32_0, %c0_i32_1 : i32, i32, i32
  }
}

</mosaic_0001>

<llo_original>
// kernel: tpu_custom_call.1
$region0: #{tpu_custom_call.1}
  #allocation0 [shape = 'u32[]', space=smem, size = 0x4, offset = 0x4, fixed_abs, tag = 'smem constant byte address 0x4 - core index']
  #allocation1 [shape = 'u32[72,128]{1,0:T(1,128)}', space=vmem, size = 0x9000, scoped, tag = 'internal scratch']
  #allocation2 [shape = 'f32[2,18,54]{2,1,0:T(8,128)}', space=vmem, size = 0x6000, scoped, tag = 'scratch operand']
  %s0 = inlined_call_operand.hbm [shape: f32[2,16,48], index: 0, kind: input, shape index: {}]
  %s1 = inlined_call_operand.hbm [shape: f32[1,54], index: 1, kind: input, shape index: {}]
  %s2 = inlined_call_operand.hbm [shape: f32[3,54,128], index: 2, kind: input, shape index: {}]
  %s3 = inlined_call_operand.vmem [shape: f32[1,128], index: 3, kind: input, shape index: {}]
  %s4 = inlined_call_operand.hbm [shape: f32[2,16,128], index: 4, kind: output, shape index: {}]
  %s5 = sld [smem:[#allocation0]]
  $region38: #{tpu_custom_call.1} parent=0
    _
  %s7 = ssub.s32 1, %s5
  %s8 = scalar_select 0, %s7, %s5
  $region1: #{tpu_custom_call.1} parent=0
    #allocation3 [shape = 'u8[16384]{0}', space=vmem, size = 0x4000, scoped, tag = 'input window, operand 0, single buffered']
    #allocation4 [shape = 's32[1]{0}', space=sflag, size = 0x4, scoped, tag = 'scoped memory for tpu_custom_call.1']
    #allocation5 [shape = 's32[1]{0}', space=sflag, size = 0x4, scoped, tag = 'scoped memory for tpu_custom_call.1']
    #allocation6 [shape = 'u8[512]{0}', space=vmem, size = 0x400, scoped, tag = 'input window, operand 1, single buffered']
    #allocation7 [shape = 's32[1]{0}', space=sflag, size = 0x4, scoped, tag = 'scoped memory for tpu_custom_call.1']
    #allocation8 [shape = 'u8[86016]{0}', space=vmem, size = 0x15000, scoped, tag = 'input window, operand 2, single buffered']
    #allocation9 [shape = 'u8[16384]{0}', space=vmem, size = 0x4000, scoped, tag = 'output window, operand 0, single buffered']
    %9 = vsyncpa [#allocation4], 0
    %10 = vsyncpa [#allocation7], 0
    %11 = vsyncpa [#allocation5], 0
    // Predicated region
    $region2: #{tpu_custom_call.1} parent=1 // pred_check
      _
    $region3: #{tpu_custom_call.1} parent=1 // pred_check_branch
      %13 = sbr.rel (0) target = $region5
    $region4: #{tpu_custom_call.1} parent=1 // pred_region
      %15 = vsyncadd [#allocation4], 0
      %s16 = sshll.u32 %s0, 4
      %s17 = int_to_ptr.hbm [resolvable:$true] %s16
      %s18 = sshll.u32 [#allocation3], 4
      %s19 = int_to_ptr.vmem [resolvable:$true] %s18
      %24 = dma.hbm_to_vmem [thread:$0]  %s17, 512, %s19, [#allocation4], 128, 128, 8
    $region5: #{tpu_custom_call.1} parent=1 // pred_fallthru
      _
    // Predicated region
    $region6: #{tpu_custom_call.1} parent=1 // pred_check
      _
    $region7: #{tpu_custom_call.1} parent=1 // pred_check_branch
      %26 = sbr.rel (0) target = $region9
    $region8: #{tpu_custom_call.1} parent=1 // pred_region
      %28 = vsyncadd [#allocation7], 0
      %s30 = sshll.u32 %s1, 4
      %s31 = int_to_ptr.hbm [resolvable:$true] %s30
      %s32 = sshll.u32 [#allocation6], 4
      %s33 = int_to_ptr.vmem [resolvable:$true] %s32
      %35 = dma.hbm_to_vmem [thread:$0]  %s31, 16, %s33, [#allocation7]
    $region9: #{tpu_custom_call.1} parent=1 // pred_fallthru
      _
    // Predicated region
    $region10: #{tpu_custom_call.1} parent=1 // pred_check
      _
    $region11: #{tpu_custom_call.1} parent=1 // pred_check_branch
      %37 = sbr.rel (0) target = $region13
    $region12: #{tpu_custom_call.1} parent=1 // pred_region
      %39 = vsyncadd [#allocation7], 0
      %s40 = sshll.u32 %s2, 4
      %s41 = int_to_ptr.hbm [resolvable:$true] %s40
      %s42 = sshll.u32 [#allocation8], 4
      %s43 = int_to_ptr.vmem [resolvable:$true] %s42
      %48 = dma.hbm_to_vmem [thread:$0]  %s41, 2688, %s43, [#allocation7], 128, 128, 8
    $region13: #{tpu_custom_call.1} parent=1 // pred_fallthru
      _
    // Predicated region
    $region14: #{tpu_custom_call.1} parent=1 // pred_check
      _
    $region15: #{tpu_custom_call.1} parent=1 // pred_check_branch
      %50 = sbr.rel (0) target = $region17
    $region16: #{tpu_custom_call.1} parent=1 // pred_region
      _
    $region17: #{tpu_custom_call.1} parent=1 // pred_fallthru
      _
    // Predicated region
    $region18: #{tpu_custom_call.1} parent=1 // pred_check
      _
    $region19: #{tpu_custom_call.1} parent=1 // pred_check_branch
      %52 = sbr.rel (0) target = $region21
    $region20: #{tpu_custom_call.1} parent=1 // pred_region
      %54 = dma.done [#allocation4], 512
    $region21: #{tpu_custom_call.1} parent=1 // pred_fallthru
      _
    // Predicated region
    $region22: #{tpu_custom_call.1} parent=1 // pred_check
      _
    $region23: #{tpu_custom_call.1} parent=1 // pred_check_branch
      %56 = sbr.rel (0) target = $region25
    $region24: #{tpu_custom_call.1} parent=1 // pred_region
      %58 = dma.done [#allocation7], 16
    $region25: #{tpu_custom_call.1} parent=1 // pred_fallthru
      _
    // Predicated region
    $region26: #{tpu_custom_call.1} parent=1 // pred_check
      _
    $region27: #{tpu_custom_call.1} parent=1 // pred_check_branch
      %60 = sbr.rel (0) target = $region29
    $region28: #{tpu_custom_call.1} parent=1 // pred_region
      %62 = dma.done [#allocation7], 2688
    $region29: #{tpu_custom_call.1} parent=1 // pred_fallthru
      _
    %v63 = vld [vmem:[#allocation6] sm:$0x1]
    %v65 = vperm.slane %v63, 0
    %vm67 = vcmask 441344
    %68 = vst.msk [vmem:[#allocation2] sm:$0xff] %vm67, %v65
    %69 = vst.msk [vmem:[#allocation2 + $0x8] sm:$0xff] %vm67, %v65
    %vm70 = vcmask 435200
    %71 = vst.msk [vmem:[#allocation2 + $0x10] sm:$0x3] %vm70, %v65
    %72 = vst.msk [vmem:[#allocation2 + $0x18] sm:$0xff] %vm67, %v65
    %73 = vst.msk [vmem:[#allocation2 + $0x20] sm:$0xff] %vm67, %v65
    %74 = vst.msk [vmem:[#allocation2 + $0x28] sm:$0x3] %vm70, %v65
    %v75 = vld [vmem:[#allocation3] sm:$0xff]
    %v76 = vld [vmem:[#allocation3 + $0x8] sm:$0xff]
    %v77 = vld [vmem:[#allocation3 + $0x10] sm:$0xff]
    %v78 = vld [vmem:[#allocation3 + $0x18] sm:$0xff]
    %83 = vrot.lane.b32.xlu0 %v75, 3
    %v84 = vpop.permute.xlu0 %83
    %85 = vrot.lane.b32.xlu0 %v76, 3
    %v86 = vpop.permute.xlu0 %85
    %87 = vrot.lane.b32.xlu0 %v77, 3
    %v88 = vpop.permute.xlu0 %87
    %89 = vrot.lane.b32.xlu0 %v78, 3
    %v90 = vpop.permute.xlu0 %89
    %vm95 = vcmask 416792
    %96 = vst.msk [vmem:[#allocation2 + $0x1] sm:$0xff] %vm95, %v84
    %97 = vst.msk [vmem:[#allocation2 + $0x9] sm:$0xff] %vm95, %v86
    %98 = vst.msk [vmem:[#allocation2 + $0x19] sm:$0xff] %vm95, %v88
    %99 = vst.msk [vmem:[#allocation2 + $0x21] sm:$0xff] %vm95, %v90
    %v100 = vld [vmem:[%s3] sm:$0x1]
    %v102 = vperm.slane %v100, 0
    %v104 = vld [vmem:[#allocation2] sm:$0xff]
    %v105 = vld [vmem:[#allocation2 + $0x8] sm:$0xff]
    %v106 = vld [vmem:[#allocation2 + $0x18] sm:$0xff]
    %v107 = vld [vmem:[#allocation2 + $0x20] sm:$0xff]
    %v108 = vld [vmem:[#allocation8] sm:$0xff]
    %v109 = vld [vmem:[#allocation8 + $0x8] sm:$0xff]
    %v110 = vld [vmem:[#allocation8 + $0x10] sm:$0xff]
    %v111 = vld [vmem:[#allocation8 + $0x18] sm:$0xff]
    %v112 = vld [vmem:[#allocation8 + $0x20] sm:$0xff]
    %v113 = vld [vmem:[#allocation8 + $0x28] sm:$0xff]
    %v114 = vld [vmem:[#allocation8 + $0x30] sm:$0x3f]
    %v116 = vsel %vm67, %v104, 0
    %v119 = vsel %vm67, %v105, 0
    %v122 = vsel %vm67, %v106, 0
    %v125 = vsel %vm67, %v107, 0
    %vm127 = vcmask 1045504
    %v129 = vsel %vm127, %v114, 0
    %131 = vmatpush.msra.mxu0 0.0
    %132 = vmatpush.msra.mxu0 0.0
    %133 = vmatpush.msra.mxu0 0.0
    %134 = vmatpush.msra.mxu0 0.0
    %135 = vmatpush.msra.mxu0 0.0
    %136 = vmatpush.msra.mxu0 0.0
    %137 = vmatpush.msra.mxu0 0.0
    %138 = vmatpush.msra.mxu0 0.0
    %139 = vmatpush.msra.mxu0 0.0
    %140 = vmatpush.msra.mxu0 %v129
    %141 = vmatpush.msra.mxu0 %v113
    %142 = vmatpush.msra.mxu0 %v112
    %143 = vmatpush.msra.mxu0 %v111
    %144 = vmatpush.msra.mxu0 %v110
    %145 = vmatpush.msra.mxu0 %v109
    %146 = vmatpush.msra.mxu0 %v108
    %147 = vmatmul.f32.gmra.mxu0 %v116
    %v148 = vpop.f32.mrf.mxu0
    %v149 = vadd.f32 0.0, %v148
    %150 = vmatmul.f32.gmra.mxu0 %v119
    %v151 = vpop.f32.mrf.mxu0
    %v152 = vadd.f32 0.0, %v151
    %153 = vmatmul.f32.gmra.mxu0 %v122
    %v154 = vpop.f32.mrf.mxu0
    %v155 = vadd.f32 0.0, %v154
    %156 = vmatmul.f32.gmra.mxu0 %v125
    %v157 = vpop.f32.mrf.mxu0
    %v158 = vadd.f32 0.0, %v157
    %159 = vdwg.mxu0
    %v160 = vadd.f32 %v102, %v149
    %v161 = vadd.f32 %v102, %v152
    %v162 = vadd.f32 %v102, %v155
    %v163 = vadd.f32 %v102, %v158
    %v164 = vld [vmem:[#allocation2 + $0x1] sm:$0xff]
    %v165 = vld [vmem:[#allocation2 + $0x9] sm:$0xff]
    %v166 = vld [vmem:[#allocation2 + $0x19] sm:$0xff]
    %v167 = vld [vmem:[#allocation2 + $0x21] sm:$0xff]
    %s168 = scalar_lea.vmem [#allocation8], 56
    %v169 = vld [vmem:[%s168] sm:$0xff]
    %v170 = vld [vmem:[%s168 + $0x8] sm:$0xff]
    %v171 = vld [vmem:[%s168 + $0x10] sm:$0xff]
    %v172 = vld [vmem:[%s168 + $0x18] sm:$0xff]
    %v173 = vld [vmem:[%s168 + $0x20] sm:$0xff]
    %v174 = vld [vmem:[%s168 + $0x28] sm:$0xff]
    %v175 = vld [vmem:[%s168 + $0x30] sm:$0x3f]
    %v177 = vsel %vm67, %v164, 0
    %v180 = vsel %vm67, %v165, 0
    %v183 = vsel %vm67, %v166, 0
    %v186 = vsel %vm67, %v167, 0
    %v189 = vsel %vm127, %v175, 0
    %191 = vmatpush.msra.mxu0 0.0
    %192 = vmatpush.msra.mxu0 0.0
    %193 = vmatpush.msra.mxu0 0.0
    %194 = vmatpush.msra.mxu0 0.0
    %195 = vmatpush.msra.mxu0 0.0
    %196 = vmatpush.msra.mxu0 0.0
    %197 = vmatpush.msra.mxu0 0.0
    %198 = vmatpush.msra.mxu0 0.0
    %199 = vmatpush.msra.mxu0 0.0
    %200 = vmatpush.msra.mxu0 %v189
    %201 = vmatpush.msra.mxu0 %v174
    %202 = vmatpush.msra.mxu0 %v173
    %203 = vmatpush.msra.mxu0 %v172
    %204 = vmatpush.msra.mxu0 %v171
    %205 = vmatpush.msra.mxu0 %v170
    %206 = vmatpush.msra.mxu0 %v169
    %207 = vmatmul.f32.gmra.mxu0 %v177
    %v208 = vpop.f32.mrf.mxu0
    %v209 = vadd.f32 0.0, %v208
    %210 = vmatmul.f32.gmra.mxu0 %v180
    %v211 = vpop.f32.mrf.mxu0
    %v212 = vadd.f32 0.0, %v211
    %213 = vmatmul.f32.gmra.mxu0 %v183
    %v214 = vpop.f32.mrf.mxu0
    %v215 = vadd.f32 0.0, %v214
    %216 = vmatmul.f32.gmra.mxu0 %v186
    %v217 = vpop.f32.mrf.mxu0
    %v218 = vadd.f32 0.0, %v217
    %219 = vdwg.mxu0
    %v220 = vadd.f32 %v160, %v209
    %v221 = vadd.f32 %v161, %v212
    %v222 = vadd.f32 %v162, %v215
    %v223 = vadd.f32 %v163, %v218
    %v224 = vld [vmem:[#allocation2 + $0x2] sm:$0xff]
    %v225 = vld [vmem:[#allocation2 + $0xa] sm:$0xff]
    %v226 = vld [vmem:[#allocation2 + $0x1a] sm:$0xff]
    %v227 = vld [vmem:[#allocation2 + $0x22] sm:$0xff]
    %s228 = scalar_lea.vmem [#allocation8], 112
    %v229 = vld [vmem:[%s228] sm:$0xff]
    %v230 = vld [vmem:[%s228 + $0x8] sm:$0xff]
    %v231 = vld [vmem:[%s228 + $0x10] sm:$0xff]
    %v232 = vld [vmem:[%s228 + $0x18] sm:$0xff]
    %v233 = vld [vmem:[%s228 + $0x20] sm:$0xff]
    %v234 = vld [vmem:[%s228 + $0x28] sm:$0xff]
    %v235 = vld [vmem:[%s228 + $0x30] sm:$0x3f]
    %v237 = vsel %vm67, %v224, 0
    %v240 = vsel %vm67, %v225, 0
    %v243 = vsel %vm67, %v226, 0
    %v246 = vsel %vm67, %v227, 0
    %v249 = vsel %vm127, %v235, 0
    %251 = vmatpush.msra.mxu0 0.0
    %252 = vmatpush.msra.mxu0 0.0
    %253 = vmatpush.msra.mxu0 0.0
    %254 = vmatpush.msra.mxu0 0.0
    %255 = vmatpush.msra.mxu0 0.0
    %256 = vmatpush.msra.mxu0 0.0
    %257 = vmatpush.msra.mxu0 0.0
    %258 = vmatpush.msra.mxu0 0.0
    %259 = vmatpush.msra.mxu0 0.0
    %260 = vmatpush.msra.mxu0 %v249
    %261 = vmatpush.msra.mxu0 %v234
    %262 = vmatpush.msra.mxu0 %v233
    %263 = vmatpush.msra.mxu0 %v232
    %264 = vmatpush.msra.mxu0 %v231
    %265 = vmatpush.msra.mxu0 %v230
    %266 = vmatpush.msra.mxu0 %v229
    %267 = vmatmul.f32.gmra.mxu0 %v237
    %v268 = vpop.f32.mrf.mxu0
    %v269 = vadd.f32 0.0, %v268
    %270 = vmatmul.f32.gmra.mxu0 %v240
    %v271 = vpop.f32.mrf.mxu0
    %v272 = vadd.f32 0.0, %v271
    %273 = vmatmul.f32.gmra.mxu0 %v243
    %v274 = vpop.f32.mrf.mxu0
    %v275 = vadd.f32 0.0, %v274
    %276 = vmatmul.f32.gmra.mxu0 %v246
    %v277 = vpop.f32.mrf.mxu0
    %v278 = vadd.f32 0.0, %v277
    %279 = vdwg.mxu0
    %v280 = vadd.f32 %v220, %v269
    %v281 = vadd.f32 %v221, %v272
    %v282 = vadd.f32 %v222, %v275
    %v283 = vadd.f32 %v223, %v278
    %v284 = vmax.f32 %v280, 0.0
    %v285 = vmax.f32 %v281, 0.0
    %v286 = vmax.f32 %v282, 0.0
    %v287 = vmax.f32 %v283, 0.0
    %288 = vst [vmem:[#allocation9] sm:$0xff] %v284
    %289 = vst [vmem:[#allocation9 + $0x8] sm:$0xff] %v285
    %290 = vst [vmem:[#allocation9 + $0x10] sm:$0xff] %v286
    %291 = vst [vmem:[#allocation9 + $0x18] sm:$0xff] %v287
    // Predicated region
    $region30: #{tpu_custom_call.1} parent=1 // pred_check
      _
    $region31: #{tpu_custom_call.1} parent=1 // pred_check_branch
      %293 = sbr.rel (0) target = $region33
    $region32: #{tpu_custom_call.1} parent=1 // pred_region
      %295 = vsyncadd [#allocation5], 0
      %s296 = sshll.u32 [#allocation9], 4
      %s297 = int_to_ptr.vmem [resolvable:$true] %s296
      %s298 = sshll.u32 %s4, 4
      %s299 = int_to_ptr.hbm [resolvable:$true] %s298
      %304 = dma.vmem_to_hbm [thread:$0]  %s297, 512, %s299, [#allocation5], 128, 128, 8
    $region33: #{tpu_custom_call.1} parent=1 // pred_fallthru
      _
    // Predicated region
    $region34: #{tpu_custom_call.1} parent=1 // pred_check
      _
    $region35: #{tpu_custom_call.1} parent=1 // pred_check_branch
      %306 = sbr.rel (0) target = $region37
    $region36: #{tpu_custom_call.1} parent=1 // pred_region
      %308 = dma.done [#allocation5], 512
    $region37: #{tpu_custom_call.1} parent=1 // pred_fallthru
      _
    %309 = vsyncpa [#allocation4], 1
    %310 = vsyncpa [#allocation7], 1
    %311 = vsyncpa [#allocation5], 1

</llo_original>
